<compile_context>
chip_gen: v7x
topology: tpu7x:2x2x1
jax: 0.10.0
libtpu: 0.0.40
codegen_flags: <defaults>
</compile_context>

<pallas_src>
import functools

import numpy as np
import jax
import jax.numpy as jnp
from jax import lax
from jax.experimental import pallas as pl
from jax.experimental.pallas import tpu as pltpu


def _round_up(x, m):
    return (x + m - 1) // m * m


# ---------------------------------------------------------------------------
# t == 0 path:  hist[p, d] = sum_n mask[p, n] * onehot(deg_full[n])[d]
# One tiled bf16 matmul on the MXU with a lane-dense (>=128-wide) output.
# Grid = (p_tile, k_tile); output block resident across k (accumulator).
# ---------------------------------------------------------------------------
def _full_deg_hist_kernel(mask_ref, onehot_ref, out_ref):
    k = pl.program_id(1)

    @pl.when(k == 0)
    def _():
        out_ref[...] = jnp.zeros_like(out_ref)

    out_ref[...] += jnp.dot(mask_ref[...], onehot_ref[...],
                            preferred_element_type=jnp.float32)


# ---------------------------------------------------------------------------
# t > 0 path: induced-subgraph degrees, then per-spotlight histogram.
#   deg_sub[p, n] = sum_m mask[p, m] * A[m, n]     (MXU, f32 scratch over k)
#   hist[p, d]   += #{ n : member(p, n) and deg_sub[p, n] == d }
# Grid = (p_tile, n_col_tile, k_tile), k innermost; the histogram epilogue
# runs once per column tile on the last k step, in vreg-resident row slabs.
# ---------------------------------------------------------------------------
def _make_subgraph_hist_kernel(out_dim, out_pad, tp, tn, slab, band):
    n_slabs = tp // slab
    pad_lanes = out_pad - out_dim

    def kernel(mask_lhs_ref, a_ref, mask_col_ref, out_ref, acc_ref):
        j = pl.program_id(1)
        k = pl.program_id(2)
        nk = pl.num_programs(2)

        @pl.when(jnp.logical_and(j == 0, k == 0))
        def _():
            out_ref[...] = jnp.zeros_like(out_ref)

        @pl.when(k == 0)
        def _():
            acc_ref[...] = jnp.zeros_like(acc_ref)

        if band:
            # mask LHS is a VMEM-resident (tp, npad) row band; slice the
            # current k chunk in-kernel (no per-j re-DMA of the mask).
            off = pl.multiple_of(k * tn, 128)
            lhs = mask_lhs_ref[:, pl.ds(off, tn)]
        else:
            lhs = mask_lhs_ref[...]

        # f32 MXU accumulation is a correctness invariant: integer degrees are
        # later matched with exact float equality (exact below 2^24).
        acc_ref[...] += jnp.dot(lhs, a_ref[...],
                                preferred_element_type=jnp.float32)

        @pl.when(k == nk - 1)
        def _():
            # Lane-dense histogram epilogue.  Each row slab of deg_sub stays
            # in vregs while all out_dim bins are counted, and the slab's
            # (slab, out_pad) contribution is added with one 128-lane store.
            def slab_body(s, carry):
                rs = pl.multiple_of(s * slab, slab)
                d_slab = acc_ref[pl.ds(rs, slab), :]            # (slab, tn) f32
                m_slab = mask_col_ref[pl.ds(rs, slab), :]       # (slab, tn) bf16
                # Non-members -> -1 so they never match a bin (mask hoisted
                # out of the per-bin compares).
                d_masked = jnp.where(m_slab > 0.5, d_slab, jnp.float32(-1.0))
                cols = [jnp.sum((d_masked == jnp.float32(d)).astype(jnp.float32),
                                axis=1, keepdims=True)
                        for d in range(out_dim)]
                if pad_lanes:
                    cols.append(jnp.zeros((slab, pad_lanes), jnp.float32))
                out_ref[pl.ds(rs, slab), :] += jnp.concatenate(cols, axis=1)
                return carry

            lax.fori_loop(0, n_slabs, slab_body, 0, unroll=True)

    return kernel


@functools.partial(jax.jit, static_argnums=(0, 3))
def hard_embedder(t, spot_mask, adj, out_dim):
    """Degree-histogram embedding of each spotlight.

    t:         Python int level. t == 0 bins full-graph degrees of spotlight
               members; t > 0 bins induced-subgraph degrees.
    spot_mask: (P, N) {0,1} float spotlight-membership mask.
    adj:       (N, N) symmetric {0,1} float adjacency (no self loops).
    Returns:   (P, out_dim) float32.
    """
    P, N = spot_mask.shape
    out_pad = _round_up(max(out_dim, 128), 128)

    if t == 0:
        # HBM-bound on the mask stream: use big tiles to amortize per-step
        # overhead; adjacency is read exactly once (row sum), never by kernel.
        tp = 512 if P > 512 else _round_up(max(P, 8), 16)
        tn = 1024 if N > 1024 else _round_up(max(N, 128), 128)
        ppad, npad = _round_up(P, tp), _round_up(N, tn)

        mask_bf = spot_mask.astype(jnp.bfloat16)            # {0,1}: exact
        if (ppad, npad) != (P, N):
            mask_bf = jnp.pad(mask_bf, ((0, ppad - P), (0, npad - N)))

        deg_full = jnp.sum(adj.astype(jnp.float32), axis=1)          # (N,)
        bins = jnp.arange(out_pad, dtype=jnp.float32)
        onehot = ((deg_full[:, None] == bins[None, :]) &
                  (bins[None, :] < out_dim)).astype(jnp.bfloat16)    # (N, out_pad)
        if npad != N:
            onehot = jnp.pad(onehot, ((0, npad - N), (0, 0)))

        out = pl.pallas_call(
            _full_deg_hist_kernel,
            out_shape=jax.ShapeDtypeStruct((ppad, out_pad), jnp.float32),
            grid=(ppad // tp, npad // tn),
            in_specs=[
                pl.BlockSpec((tp, tn), lambda i, k: (i, k)),         # mask
                pl.BlockSpec((tn, out_pad), lambda i, k: (k, 0)),    # one-hot degs
            ],
            out_specs=pl.BlockSpec((tp, out_pad), lambda i, k: (i, 0)),
            compiler_params=pltpu.CompilerParams(
                dimension_semantics=("parallel", "arbitrary")),
        )(mask_bf, onehot)
        return out[:P, :out_dim]

    # ------------------------------ t > 0 --------------------------------
    if P <= 256:
        tp = _round_up(max(P, 8), 16)
    elif P <= 1024:
        tp = 256        # keep >= 2 spotlight tiles so both v7x TCs get work
    else:
        tp = 512        # halves adjacency re-reads vs 256 (v6e/v7x roofline)
    tn = 512 if N > 512 else _round_up(max(N, 128), 128)
    ppad, npad = _round_up(P, tp), _round_up(N, tn)
    slab = 32 if tp % 32 == 0 else 16          # vreg-resident epilogue slabs

    # Mask-LHS row band must stay v5e-safe (16 MiB scoped-VMEM default).
    band_bytes = 2 * tp * npad * 2
    fixed_bytes = (2 * tn * tn * 2 + 2 * tp * tn * 2 + tp * tn * 4
                   + 2 * tp * out_pad * 4)
    band = (band_bytes + fixed_bytes) <= 12 * 1024 * 1024

    mask_bf = spot_mask.astype(jnp.bfloat16)
    adj_bf = adj.astype(jnp.bfloat16)
    # TODO(synk): when shapes are already tile-aligned the pad pass is skipped;
    # fully ragged in-kernel handling would remove it in the general case too.
    if (ppad, npad) != (P, N):
        mask_bf = jnp.pad(mask_bf, ((0, ppad - P), (0, npad - N)))
    if npad != N:
        adj_bf = jnp.pad(adj_bf, ((0, npad - N), (0, npad - N)))

    kernel = _make_subgraph_hist_kernel(out_dim, out_pad, tp, tn, slab, band)
    lhs_spec = (pl.BlockSpec((tp, npad), lambda i, j, k: (i, 0)) if band
                else pl.BlockSpec((tp, tn), lambda i, j, k: (i, k)))

    out = pl.pallas_call(
        kernel,
        out_shape=jax.ShapeDtypeStruct((ppad, out_pad), jnp.float32),
        grid=(ppad // tp, npad // tn, npad // tn),
        in_specs=[
            lhs_spec,                                          # mask (LHS)
            pl.BlockSpec((tn, tn), lambda i, j, k: (k, j)),    # adjacency
            pl.BlockSpec((tp, tn), lambda i, j, k: (i, j)),    # mask (columns)
        ],
        out_specs=pl.BlockSpec((tp, out_pad), lambda i, j, k: (i, 0)),
        scratch_shapes=[pltpu.VMEM((tp, tn), jnp.float32)],
        compiler_params=pltpu.CompilerParams(
            dimension_semantics=("parallel", "arbitrary", "arbitrary")),
    )(mask_bf, adj_bf, mask_bf)
    return out[:P, :out_dim]


def reference(t, spot_mask, adj, out_dim):
    """Pure-numpy re-implementation of the PyTorch/networkx forward."""
    spot_mask = np.asarray(spot_mask)
    adj = np.asarray(adj)
    P, N = spot_mask.shape
    out = np.zeros((P, out_dim), np.float32)
    deg_full = adj.sum(axis=1)
    for p in range(P):
        nodes = np.where(spot_mask[p] > 0)[0]
        for n in nodes:
            d = int(deg_full[n]) if t == 0 else int(adj[n][nodes].sum())
            if d < out_dim:
                out[p, d] += 1.0
    return out


if __name__ == "__main__":
    # Small synthetic graph consistent with the module's forward signature:
    #   nodes_initial -> N nodes, edge_index_initial -> (2, E),
    #   spotlights[t] -> P spotlights encoded as a (P, N) membership mask.
    # TODO(synk): networkx graph construction from edge_index is plain-JAX glue
    # (dense symmetric adjacency), not part of the Pallas kernels.
    N, P, OUT_DIM, E = 16, 8, 16, 24
    key = jax.random.PRNGKey(0)
    k1, k2, k3 = jax.random.split(key, 3)

    src = jax.random.randint(k1, (E,), 0, N)
    offs = jax.random.randint(k2, (E,), 1, N)
    dst = (src + offs) % N                      # guarantees no self loops
    edge_index_initial = jnp.stack([src, dst])  # (2, E), like the torch input

    adj = jnp.zeros((N, N), jnp.float32)
    adj = adj.at[edge_index_initial[0], edge_index_initial[1]].set(1.0)
    adj = adj.at[edge_index_initial[1], edge_index_initial[0]].set(1.0)

    spot_mask = (jax.random.uniform(k3, (P, N)) < 0.4).astype(jnp.float32)

    ok = True
    for t in (0, 1):
        out = jax.block_until_ready(hard_embedder(t, spot_mask, adj, OUT_DIM))
        ref = reference(t, spot_mask, adj, OUT_DIM)
        ok = ok and np.allclose(np.asarray(out), ref)

    if ok:
        print("KERNEL_OK")
    else:
        raise SystemExit("mismatch vs reference")
</pallas_src>

<mosaic_0001>
module attributes {stable_mosaic.version = 11 : i64} {
  func.func @_full_deg_hist_kernel(%arg0: i32, %arg1: i32, %arg2: memref<16x128xbf16, #tpu.memory_space<vmem>>, %arg3: memref<128x128xbf16, #tpu.memory_space<vmem>>, %arg4: memref<16x128xf32, #tpu.memory_space<vmem>>) attributes {dimension_semantics = [#tpu.dimension_semantics<parallel>, #tpu.dimension_semantics<arbitrary>], iteration_bounds = array<i64: 1, 1>, scalar_prefetch = 0 : i64, scratch_operands = 0 : i64, tpu.core_type = #tpu.core_type<tc>, window_params = [{transform_indices = @transform_0, window_bounds = array<i64: 16, 128>}, {transform_indices = @transform_1, window_bounds = array<i64: 128, 128>}, {transform_indices = @transform_2, window_bounds = array<i64: 16, 128>}]} {
    %c0_i32 = arith.constant 0 : i32
    %0 = arith.cmpi eq, %arg1, %c0_i32 : i32
    %1 = arith.extui %0 : i1 to i32
    %c0_i32_0 = arith.constant 0 : i32
    %2 = arith.cmpi ne, %1, %c0_i32_0 : i32
    scf.if %2 {
      %cst_8 = arith.constant 0.000000e+00 : f32
      %9 = vector.broadcast %cst_8 : f32 to vector<16x128xf32>
      %c0_9 = arith.constant 0 : index
      %c0_10 = arith.constant 0 : index
      %10 = vector.load %arg4[%c0_9, %c0_10] : memref<16x128xf32, #tpu.memory_space<vmem>>, vector<16x128xf32>
      tpu.vector_store %arg4[%c0_9, %c0_10], %9 {strides = array<i32>} : memref<16x128xf32, #tpu.memory_space<vmem>>, vector<16x128xf32>,
    } else {
    }
    %c0 = arith.constant 0 : index
    %c0_1 = arith.constant 0 : index
    %3 = vector.load %arg4[%c0, %c0_1] : memref<16x128xf32, #tpu.memory_space<vmem>>, vector<16x128xf32>
    %c0_2 = arith.constant 0 : index
    %c0_3 = arith.constant 0 : index
    %4 = vector.load %arg2[%c0_2, %c0_3] : memref<16x128xbf16, #tpu.memory_space<vmem>>, vector<16x128xbf16>
    %c0_4 = arith.constant 0 : index
    %c0_5 = arith.constant 0 : index
    %5 = vector.load %arg3[%c0_4, %c0_5] : memref<128x128xbf16, #tpu.memory_space<vmem>>, vector<128x128xbf16>
    %cst = arith.constant dense<0.000000e+00> : vector<16x128xf32>
    %6 = tpu.matmul %4, %5, %cst {dimension_numbers = #tpu.dot_dimension_numbers<[1], [0], [0], [1], [0, 0, 1, 1], [], []>} : vector<16x128xbf16>, vector<128x128xbf16>, vector<16x128xf32> -> vector<16x128xf32>
    %7 = arith.addf %3, %6 : vector<16x128xf32>
    %c0_6 = arith.constant 0 : index
    %c0_7 = arith.constant 0 : index
    %8 = vector.load %arg4[%c0_6, %c0_7] : memref<16x128xf32, #tpu.memory_space<vmem>>, vector<16x128xf32>
    tpu.vector_store %arg4[%c0_6, %c0_7], %7 {strides = array<i32>} : memref<16x128xf32, #tpu.memory_space<vmem>>, vector<16x128xf32>,
    return
  }
  func.func @transform_0(%arg0: i32, %arg1: i32) -> (i32, i32) {
    %c0_i32 = arith.constant 0 : i32
    return %arg0, %arg1 : i32, i32
  }
  func.func @transform_1(%arg0: i32, %arg1: i32) -> (i32, i32) {
    %c0_i32 = arith.constant 0 : i32
    %c0_i32_0 = arith.constant 0 : i32
    return %arg1, %c0_i32 : i32, i32
  }
  func.func @transform_2(%arg0: i32, %arg1: i32) -> (i32, i32) {
    %c0_i32 = arith.constant 0 : i32
    %c0_i32_0 = arith.constant 0 : i32
    return %arg0, %c0_i32 : i32, i32
  }
}

</mosaic_0001>

<llo_original>
// kernel: hard_embedder.1
$region0: #{hard_embedder.1}
  #allocation0 [shape = 'u32[]', space=smem, size = 0x4, offset = 0x4, fixed_abs, tag = 'smem constant byte address 0x4 - core index']
  #allocation1 [shape = 'u32[144,128]{1,0:T(1,128)}', space=vmem, size = 0x12000, scoped, tag = 'internal scratch']
  %s0 = inlined_call_operand.vmem [shape: bf16[16,128], index: 0, kind: input, shape index: {}]
  %s1 = inlined_call_operand.vmem [shape: bf16[128,128], index: 1, kind: input, shape index: {}]
  %s2 = inlined_call_operand.vmem [shape: f32[16,128], index: 2, kind: output, shape index: {}]
  %s3 = sld [smem:[#allocation0]]
  $region22: #{hard_embedder.1} parent=0
    _
  %s5 = ssub.s32 1, %s3
  %s6 = scalar_select 0, %s5, %s3
  // Predicated region
  $region2: #{hard_embedder.1} parent=0 // pred_check
    _
  $region3: #{hard_embedder.1} parent=0 // pred_check_branch
    %8 = sbr.rel (0) target = $region5
  $region4: #{hard_embedder.1} parent=0 // pred_region
    _
  $region5: #{hard_embedder.1} parent=0 // pred_fallthru
    _
  // Predicated region
  $region6: #{hard_embedder.1} parent=0 // pred_check
    _
  $region7: #{hard_embedder.1} parent=0 // pred_check_branch
    %10 = sbr.rel (0) target = $region9
  $region8: #{hard_embedder.1} parent=0 // pred_region
    _
  $region9: #{hard_embedder.1} parent=0 // pred_fallthru
    _
  %p12 = scmp.eq.s32.totalorder 0, 0
  // Predicated region
  $region10: #{hard_embedder.1} parent=0 // pred_check
    %p13 = pneg %p12
  $region11: #{hard_embedder.1} parent=0 // pred_check_branch
    %15 = sbr.rel (%p13) target = $region13
  $region12: #{hard_embedder.1} parent=0 // pred_region
    %16 = vst [vmem:[%s2] sm:$0xff] 0.0
    %17 = vst [vmem:[%s2 + $0x8] sm:$0xff] 0.0
  $region13: #{hard_embedder.1} parent=0 // pred_fallthru
    _
  %v18 = vld [vmem:[%s2] sm:$0xff]
  %v19 = vld [vmem:[%s2 + $0x8] sm:$0xff]
  %v20 = vld [vmem:[%s0] sm:$0xf]
  %v21 = vld [vmem:[%s0 + $0x4] sm:$0xf]
  %v22 = vld [vmem:[%s1] sm:$0xf]
  %v23 = vld [vmem:[%s1 + $0x4] sm:$0xf]
  %v24 = vld [vmem:[%s1 + $0x8] sm:$0xf]
  %v25 = vld [vmem:[%s1 + $0xc] sm:$0xf]
  %v26 = vld [vmem:[%s1 + $0x10] sm:$0xf]
  %v27 = vld [vmem:[%s1 + $0x14] sm:$0xf]
  %v28 = vld [vmem:[%s1 + $0x18] sm:$0xf]
  %v29 = vld [vmem:[%s1 + $0x1c] sm:$0xf]
  %v30 = vld [vmem:[%s1 + $0x20] sm:$0xf]
  %v31 = vld [vmem:[%s1 + $0x24] sm:$0xf]
  %v32 = vld [vmem:[%s1 + $0x28] sm:$0xf]
  %v33 = vld [vmem:[%s1 + $0x2c] sm:$0xf]
  %v34 = vld [vmem:[%s1 + $0x30] sm:$0xf]
  %v35 = vld [vmem:[%s1 + $0x34] sm:$0xf]
  %v36 = vld [vmem:[%s1 + $0x38] sm:$0xf]
  %v37 = vld [vmem:[%s1 + $0x3c] sm:$0xf]
  %v40 = vunpack.c.l.b16 %v20
  %v41 = vunpack.c.l.b16 %v21
  %v42 = vpack.c.b16 %v41, %v40
  %v60 = vunpack.c.l.b16 %v22
  %v61 = vunpack.c.l.b16 %v23
  %v62 = vunpack.c.l.b16 %v24
  %v63 = vunpack.c.l.b16 %v25
  %v64 = vunpack.c.l.b16 %v26
  %v65 = vunpack.c.l.b16 %v27
  %v66 = vunpack.c.l.b16 %v28
  %v67 = vunpack.c.l.b16 %v29
  %v68 = vunpack.c.l.b16 %v30
  %v69 = vunpack.c.l.b16 %v31
  %v70 = vunpack.c.l.b16 %v32
  %v71 = vunpack.c.l.b16 %v33
  %v72 = vunpack.c.l.b16 %v34
  %v73 = vunpack.c.l.b16 %v35
  %v74 = vunpack.c.l.b16 %v36
  %v75 = vunpack.c.l.b16 %v37
  %v76 = vpack.c.b16 %v61, %v60
  %v77 = vpack.c.b16 %v63, %v62
  %v78 = vpack.c.b16 %v65, %v64
  %v79 = vpack.c.b16 %v67, %v66
  %v80 = vpack.c.b16 %v69, %v68
  %v81 = vpack.c.b16 %v71, %v70
  %v82 = vpack.c.b16 %v73, %v72
  %v83 = vpack.c.b16 %v75, %v74
  %92 = vmatprep.subr.bf16.mxu0 0
  %93 = vmatpush1.bf16.msra.mxu0 %v76
  %94 = vmatprep.subr.bf16.mxu0 0
  %95 = vmatpush1.bf16.msra.mxu0 %v77
  %96 = vmatprep.subr.bf16.mxu0 0
  %97 = vmatpush1.bf16.msra.mxu0 %v78
  %98 = vmatprep.subr.bf16.mxu0 0
  %99 = vmatpush1.bf16.msra.mxu0 %v79
  %100 = vmatprep.subr.bf16.mxu0 0
  %101 = vmatpush1.bf16.msra.mxu0 %v80
  %102 = vmatprep.subr.bf16.mxu0 0
  %103 = vmatpush1.bf16.msra.mxu0 %v81
  %104 = vmatprep.subr.bf16.mxu0 0
  %105 = vmatpush1.bf16.msra.mxu0 %v82
  %106 = vmatprep.subr.bf16.mxu0 0
  %107 = vmatpush1.bf16.msra.mxu0 %v83
  %108 = vmatprep.subr.bf16.mxu0 0
  %109 = vmatpush1.bf16.msra.mxu0 0
  %110 = vmatprep.subr.bf16.mxu0 0
  %111 = vmatpush1.bf16.msra.mxu0 0
  %112 = vmatprep.subr.bf16.mxu0 0
  %113 = vmatpush1.bf16.msra.mxu0 0
  %114 = vmatprep.subr.bf16.mxu0 0
  %115 = vmatpush1.bf16.msra.mxu0 0
  %116 = vmatprep.subr.bf16.mxu0 0
  %117 = vmatpush1.bf16.msra.mxu0 0
  %118 = vmatprep.subr.bf16.mxu0 0
  %119 = vmatpush1.bf16.msra.mxu0 0
  %120 = vmatprep.subr.bf16.mxu0 0
  %121 = vmatpush1.bf16.msra.mxu0 0
  %122 = vmatprep.subr.bf16.mxu0 0
  %123 = vmatpush1.bf16.msra.mxu0 0
  %124 = vmatprep.mubr.bf16.mxu0 0
  %125 = vmatmul.mubr.bf16.gmra.mrb[0].mxu0 %v42
  %v126 = vpop.f32.mrb[0].mxu0
  %v127 = vadd.f32 0.0, %v126
  %v128 = vpop.f32.mrb[0].mxu0
  %v129 = vpop.f32.mrb[0].mxu0
  %v130 = vadd.f32 0.0, %v129
  %v131 = vpop.f32.mrb[0].mxu0
  %132 = vdwg.mxu0
  %v133 = vadd.f32 %v18, %v127
  %v134 = vadd.f32 %v19, %v130
  %135 = vst [vmem:[%s2] sm:$0xff] %v133
  %136 = vst [vmem:[%s2 + $0x8] sm:$0xff] %v134
  // Predicated region
  $region14: #{hard_embedder.1} parent=0 // pred_check
    _
  $region15: #{hard_embedder.1} parent=0 // pred_check_branch
    %138 = sbr.rel (0) target = $region17
  $region16: #{hard_embedder.1} parent=0 // pred_region
    _
  $region17: #{hard_embedder.1} parent=0 // pred_fallthru
    _
  // Predicated region
  $region18: #{hard_embedder.1} parent=0 // pred_check
    _
  $region19: #{hard_embedder.1} parent=0 // pred_check_branch
    %140 = sbr.rel (0) target = $region21
  $region20: #{hard_embedder.1} parent=0 // pred_region
    _
  $region21: #{hard_embedder.1} parent=0 // pred_fallthru
    _

</llo_original>
